<compile_context>
chip_gen: v6e
topology: v6e:2x2x1
jax: 0.10.0
libtpu: 0.0.40
codegen_flags: <defaults>
</compile_context>

<pallas_src>
import math
import functools

import jax
import jax.numpy as jnp
from jax.experimental import pallas as pl
from jax.experimental.pallas import tpu as pltpu

SUBLANE = 8          # vreg sublane width (second-to-last dim)
DEFAULT_TILE_B = 256 # batch rows per grid step for large batches (multiple of 8)


def _round_up(n, m):
    return ((n + m - 1) // m) * m


# ----------------------------- fused Pallas kernel ------------------------------

def _make_fused_mlp_kernel(num_layers):
    """Kernel computing the whole MLP in one body.

    Ref layout: (x_ref, w0, b0, w1, b1, ..., w_{L-1}, b_{L-1}, o_ref).
    Weights are (in, out) bf16 (transposed once on the host), biases are (1, out)
    f32.  All dots accumulate in f32 on the MXU; activations are cast to the weight
    dtype right before each dot (bf16 is the full-rate MXU input type).
    """
    def kernel(*refs):
        x_ref = refs[0]
        o_ref = refs[-1]
        wb = refs[1:-1]

        h = x_ref[...]
        # hidden layers: Linear -> ReLU (Dropout == identity in eval mode)
        # TODO(synk): training-mode dropout (scaled Bernoulli masking via
        #             pltpu.prng_random_bits) not implemented.
        for li in range(num_layers - 1):
            w = wb[2 * li][...]
            b = wb[2 * li + 1][...]
            h = jnp.maximum(
                jnp.dot(h.astype(w.dtype), w,
                        preferred_element_type=jnp.float32) + b, 0.0)

        # output layer: Linear(..., 2) -> Softmax(dim=1)
        w = wb[-2][...]
        b = wb[-1][...]
        y = jnp.dot(h.astype(w.dtype), w, preferred_element_type=jnp.float32) + b

        m = jnp.max(y, axis=-1, keepdims=True)
        e = jnp.exp(y - m)
        denom = jnp.sum(e, axis=-1, keepdims=True)
        # approx reciprocal runs on the EUP slot -> effectively free vs. the VPU.
        o_ref[...] = (e * pl.reciprocal(denom, approx=True)).astype(o_ref.dtype)

    return kernel


# ------------------------------ parameters / layout ------------------------------

def init_classifier_params(key, in_features, sizes):
    """Deterministic PyTorch-like init: U(-1/sqrt(fan_in), 1/sqrt(fan_in)).

    Weights are stored PyTorch-style as (out_features, in_features)."""
    dims = [in_features] + list(sizes) + [2]
    params = []
    for fan_in, fan_out in zip(dims[:-1], dims[1:]):
        key, kw, kb = jax.random.split(key, 3)
        bound = 1.0 / math.sqrt(fan_in)
        w = jax.random.uniform(kw, (fan_out, fan_in), jnp.float32, -bound, bound)
        b = jax.random.uniform(kb, (fan_out,), jnp.float32, -bound, bound)
        params.append((w, b))
    return params


def prepare_params(params, param_dtype=jnp.bfloat16):
    """One-time layout prep: transpose weights to (in, out) and cast to bf16
    (halves HBM/VMEM bytes; full-rate MXU input dtype).  Biases become lane-dense
    (1, out) f32 rows.  NO host-side padding -- Mosaic pads in vregs.

    VMEM budget note (keep-all-weights-resident design): sum of in*out*2 bytes
    (x2 for double buffering) must stay well under the scoped VMEM limit
    (v7x: 64 MiB physical / 32 MiB scoped default; v5e/v6e: 128 MiB physical).
    TODO(synk): add a K-dim grid axis per layer if hidden sizes grow past that.
    """
    prepped = []
    for w, b in params:
        w_t = jnp.asarray(w.T, dtype=param_dtype)              # (in, out) bf16
        b_row = jnp.asarray(b, dtype=jnp.float32).reshape(1, -1)  # (1, out) f32
        prepped.append((w_t, b_row))
    return prepped


# ----------------------------------- forward -------------------------------------

@functools.partial(jax.jit, static_argnames=("tile_b",))
def classifier_forward(prepped, x, tile_b=DEFAULT_TILE_B):
    """Forward pass matching ClassifierModel(sizes, dropout) in eval mode."""
    B, Din = x.shape
    num_layers = len(prepped)
    out_features = prepped[-1][0].shape[1]

    if B <= tile_b:
        # Single full-array block: no batch padding, no post-kernel slice.
        tb, Bp = B, B
    else:
        # Tile the batch; tile_b is a multiple of 8 so the block shape is legal.
        tb = tile_b
        Bp = _round_up(B, tb)

    x_in = x if Bp == B else jnp.zeros((Bp, Din), x.dtype).at[:B].set(x)

    grid = (Bp // tb,)
    in_specs = [pl.BlockSpec((tb, Din), lambda i: (i, 0))]
    flat_args = [x_in]
    for w_t, b_row in prepped:
        # Constant index maps -> weight/bias blocks stay VMEM-resident across steps.
        in_specs.append(pl.BlockSpec(w_t.shape, lambda i: (0, 0)))
        in_specs.append(pl.BlockSpec(b_row.shape, lambda i: (0, 0)))
        flat_args.append(w_t)
        flat_args.append(b_row)

    out = pl.pallas_call(
        _make_fused_mlp_kernel(num_layers),
        grid=grid,
        out_shape=jax.ShapeDtypeStruct((Bp, out_features), jnp.float32),
        in_specs=in_specs,
        out_specs=pl.BlockSpec((tb, out_features), lambda i: (i, 0)),
        compiler_params=pltpu.CompilerParams(
            dimension_semantics=("parallel",)),   # megacore-shardable on v7x
    )(*flat_args)

    return out if Bp == B else out[:B]


# ------------------------------- pure-JAX reference ------------------------------

def reference_forward(params, x, compute_dtype=jnp.bfloat16):
    """Pure-JAX reference mirroring the kernel's precision policy
    (bf16 weights/activations in the dots, f32 accumulation, exact softmax)."""
    h = x
    y = None
    for li, (w, b) in enumerate(params):
        wc = jnp.asarray(w.T, dtype=compute_dtype)
        y = jnp.dot(h.astype(compute_dtype), wc,
                    preferred_element_type=jnp.float32) + b
        if li < len(params) - 1:
            h = jnp.maximum(y, 0.0)
    return jax.nn.softmax(y, axis=1)


# ------------------------------------ main ----------------------------------------

if __name__ == "__main__":
    key = jax.random.PRNGKey(0)
    k_x, k_params, k_x2 = jax.random.split(key, 3)

    batch = 8
    in_features = 32          # LazyLinear infers this from the input at init time
    sizes = [32, 16]          # hidden layer sizes
    dropout = 0.1             # unused at inference (identity)

    x = jax.random.normal(k_x, (batch, in_features), jnp.float32)
    params = init_classifier_params(k_params, in_features, sizes)
    prepped = prepare_params(params)   # one-time: transpose + bf16 cast, no padding

    probs = classifier_forward(prepped, x)
    probs = jax.block_until_ready(probs)

    assert probs.shape == (batch, 2)
    # softmax rows sum to ~1 (approx reciprocal in the epilogue -> loose tolerance)
    assert bool(jnp.allclose(jnp.sum(probs, axis=1), 1.0, atol=1e-2))
    ref = reference_forward(params, x)
    assert bool(jnp.max(jnp.abs(probs - ref)) < 1e-2)

    # Exercise the tiled (grid > 1) batch path as well.
    x_big = jax.random.normal(k_x2, (512, in_features), jnp.float32)
    probs_big = jax.block_until_ready(classifier_forward(prepped, x_big))
    assert probs_big.shape == (512, 2)
    assert bool(jnp.allclose(jnp.sum(probs_big, axis=1), 1.0, atol=1e-2))
    assert bool(jnp.max(jnp.abs(probs_big - reference_forward(params, x_big))) < 1e-2)

    print("KERNEL_OK")
</pallas_src>

<mosaic_0001>
module attributes {stable_mosaic.version = 11 : i64} {
  func.func @kernel(%arg0: i32, %arg1: memref<8x32xf32, #tpu.memory_space<vmem>>, %arg2: memref<32x32xbf16, #tpu.memory_space<vmem>>, %arg3: memref<1x32xf32, #tpu.memory_space<vmem>>, %arg4: memref<32x16xbf16, #tpu.memory_space<vmem>>, %arg5: memref<1x16xf32, #tpu.memory_space<vmem>>, %arg6: memref<16x2xbf16, #tpu.memory_space<vmem>>, %arg7: memref<1x2xf32, #tpu.memory_space<vmem>>, %arg8: memref<8x2xf32, #tpu.memory_space<vmem>>) attributes {dimension_semantics = [#tpu.dimension_semantics<parallel>], iteration_bounds = array<i64: 1>, scalar_prefetch = 0 : i64, scratch_operands = 0 : i64, tpu.core_type = #tpu.core_type<tc>, window_params = [{transform_indices = @transform_0, window_bounds = array<i64: 8, 32>}, {pipeline_mode = #tpu.pipeline_mode<synchronous>, transform_indices = @transform_1, window_bounds = array<i64: 32, 32>}, {pipeline_mode = #tpu.pipeline_mode<synchronous>, transform_indices = @transform_2, window_bounds = array<i64: 1, 32>}, {pipeline_mode = #tpu.pipeline_mode<synchronous>, transform_indices = @transform_3, window_bounds = array<i64: 32, 16>}, {pipeline_mode = #tpu.pipeline_mode<synchronous>, transform_indices = @transform_4, window_bounds = array<i64: 1, 16>}, {pipeline_mode = #tpu.pipeline_mode<synchronous>, transform_indices = @transform_5, window_bounds = array<i64: 16, 2>}, {pipeline_mode = #tpu.pipeline_mode<synchronous>, transform_indices = @transform_6, window_bounds = array<i64: 1, 2>}, {transform_indices = @transform_7, window_bounds = array<i64: 8, 2>}]} {
    %c0 = arith.constant 0 : index
    %c0_0 = arith.constant 0 : index
    %0 = vector.load %arg1[%c0, %c0_0] : memref<8x32xf32, #tpu.memory_space<vmem>>, vector<8x32xf32>
    %c0_1 = arith.constant 0 : index
    %c0_2 = arith.constant 0 : index
    %1 = vector.load %arg2[%c0_1, %c0_2] : memref<32x32xbf16, #tpu.memory_space<vmem>>, vector<32x32xbf16>
    %c0_3 = arith.constant 0 : index
    %c0_4 = arith.constant 0 : index
    %2 = vector.load %arg3[%c0_3, %c0_4] : memref<1x32xf32, #tpu.memory_space<vmem>>, vector<1x32xf32>
    %3 = arith.truncf %0 : vector<8x32xf32> to vector<8x32xbf16>
    %cst = arith.constant dense<0.000000e+00> : vector<8x32xf32>
    %4 = tpu.matmul %3, %1, %cst {dimension_numbers = #tpu.dot_dimension_numbers<[1], [0], [0], [1], [0, 0, 1, 1], [], []>} : vector<8x32xbf16>, vector<32x32xbf16>, vector<8x32xf32> -> vector<8x32xf32>
    %5 = vector.broadcast %2 : vector<1x32xf32> to vector<8x32xf32>
    %6 = arith.addf %4, %5 : vector<8x32xf32>
    %cst_5 = arith.constant 0.000000e+00 : f32
    %7 = vector.broadcast %cst_5 : f32 to vector<8x32xf32>
    %8 = arith.maximumf %6, %7 : vector<8x32xf32>
    %c0_6 = arith.constant 0 : index
    %c0_7 = arith.constant 0 : index
    %9 = vector.load %arg4[%c0_6, %c0_7] : memref<32x16xbf16, #tpu.memory_space<vmem>>, vector<32x16xbf16>
    %c0_8 = arith.constant 0 : index
    %c0_9 = arith.constant 0 : index
    %10 = vector.load %arg5[%c0_8, %c0_9] : memref<1x16xf32, #tpu.memory_space<vmem>>, vector<1x16xf32>
    %11 = arith.truncf %8 : vector<8x32xf32> to vector<8x32xbf16>
    %cst_10 = arith.constant dense<0.000000e+00> : vector<8x16xf32>
    %12 = tpu.matmul %11, %9, %cst_10 {dimension_numbers = #tpu.dot_dimension_numbers<[1], [0], [0], [1], [0, 0, 1, 1], [], []>} : vector<8x32xbf16>, vector<32x16xbf16>, vector<8x16xf32> -> vector<8x16xf32>
    %13 = vector.broadcast %10 : vector<1x16xf32> to vector<8x16xf32>
    %14 = arith.addf %12, %13 : vector<8x16xf32>
    %cst_11 = arith.constant 0.000000e+00 : f32
    %15 = vector.broadcast %cst_11 : f32 to vector<8x16xf32>
    %16 = arith.maximumf %14, %15 : vector<8x16xf32>
    %c0_12 = arith.constant 0 : index
    %c0_13 = arith.constant 0 : index
    %17 = vector.load %arg6[%c0_12, %c0_13] : memref<16x2xbf16, #tpu.memory_space<vmem>>, vector<16x2xbf16>
    %c0_14 = arith.constant 0 : index
    %c0_15 = arith.constant 0 : index
    %18 = vector.load %arg7[%c0_14, %c0_15] : memref<1x2xf32, #tpu.memory_space<vmem>>, vector<1x2xf32>
    %19 = arith.truncf %16 : vector<8x16xf32> to vector<8x16xbf16>
    %cst_16 = arith.constant dense<0.000000e+00> : vector<8x2xf32>
    %20 = tpu.matmul %19, %17, %cst_16 {dimension_numbers = #tpu.dot_dimension_numbers<[1], [0], [0], [1], [0, 0, 1, 1], [], []>} : vector<8x16xbf16>, vector<16x2xbf16>, vector<8x2xf32> -> vector<8x2xf32>
    %21 = vector.broadcast %18 : vector<1x2xf32> to vector<8x2xf32>
    %22 = arith.addf %20, %21 : vector<8x2xf32>
    %cst_17 = arith.constant dense<0xFF800000> : vector<8xf32>
    %23 = vector.multi_reduction <maximumf>, %22, %cst_17 [1] : vector<8x2xf32> to vector<8xf32>
    %24 = vector.shape_cast %23 : vector<8xf32> to vector<8x1xf32>
    %25 = vector.broadcast %24 : vector<8x1xf32> to vector<8x2xf32>
    %26 = arith.subf %22, %25 : vector<8x2xf32>
    %27 = math.exp %26 : vector<8x2xf32>
    %cst_18 = arith.constant dense<0.000000e+00> : vector<8xf32>
    %28 = vector.multi_reduction <add>, %27, %cst_18 [1] : vector<8x2xf32> to vector<8xf32>
    %29 = vector.shape_cast %28 : vector<8xf32> to vector<8x1xf32>
    %30 = tpu.reciprocal %29 {approx = true} : vector<8x1xf32> -> vector<8x1xf32>
    %31 = vector.broadcast %30 : vector<8x1xf32> to vector<8x2xf32>
    %32 = arith.mulf %27, %31 : vector<8x2xf32>
    %c0_19 = arith.constant 0 : index
    %c0_20 = arith.constant 0 : index
    %33 = vector.load %arg8[%c0_19, %c0_20] : memref<8x2xf32, #tpu.memory_space<vmem>>, vector<8x2xf32>
    tpu.vector_store %arg8[%c0_19, %c0_20], %32 {strides = array<i32>} : memref<8x2xf32, #tpu.memory_space<vmem>>, vector<8x2xf32>,
    return
  }
  func.func @transform_0(%arg0: i32) -> (i32, i32) {
    %c0_i32 = arith.constant 0 : i32
    %c0_i32_0 = arith.constant 0 : i32
    return %arg0, %c0_i32 : i32, i32
  }
  func.func @transform_1(%arg0: i32) -> (i32, i32) {
    %c0_i32 = arith.constant 0 : i32
    %c0_i32_0 = arith.constant 0 : i32
    %c0_i32_1 = arith.constant 0 : i32
    return %c0_i32, %c0_i32_0 : i32, i32
  }
  func.func @transform_2(%arg0: i32) -> (i32, i32) {
    %c0_i32 = arith.constant 0 : i32
    %c0_i32_0 = arith.constant 0 : i32
    %c0_i32_1 = arith.constant 0 : i32
    return %c0_i32, %c0_i32_0 : i32, i32
  }
  func.func @transform_3(%arg0: i32) -> (i32, i32) {
    %c0_i32 = arith.constant 0 : i32
    %c0_i32_0 = arith.constant 0 : i32
    %c0_i32_1 = arith.constant 0 : i32
    return %c0_i32, %c0_i32_0 : i32, i32
  }
  func.func @transform_4(%arg0: i32) -> (i32, i32) {
    %c0_i32 = arith.constant 0 : i32
    %c0_i32_0 = arith.constant 0 : i32
    %c0_i32_1 = arith.constant 0 : i32
    return %c0_i32, %c0_i32_0 : i32, i32
  }
  func.func @transform_5(%arg0: i32) -> (i32, i32) {
    %c0_i32 = arith.constant 0 : i32
    %c0_i32_0 = arith.constant 0 : i32
    %c0_i32_1 = arith.constant 0 : i32
    return %c0_i32, %c0_i32_0 : i32, i32
  }
  func.func @transform_6(%arg0: i32) -> (i32, i32) {
    %c0_i32 = arith.constant 0 : i32
    %c0_i32_0 = arith.constant 0 : i32
    %c0_i32_1 = arith.constant 0 : i32
    return %c0_i32, %c0_i32_0 : i32, i32
  }
  func.func @transform_7(%arg0: i32) -> (i32, i32) {
    %c0_i32 = arith.constant 0 : i32
    %c0_i32_0 = arith.constant 0 : i32
    return %arg0, %c0_i32 : i32, i32
  }
}

</mosaic_0001>

<llo_original>
// kernel: classifier_forward.1
$region0: #{classifier_forward.1}
  #allocation0 [shape = 'u32[]', space=smem, size = 0x4, offset = 0x4, fixed_abs, tag = 'smem constant byte address 0x4 - core index']
  #allocation1 [shape = 'u32[144,128]{1,0:T(1,128)}', space=vmem, size = 0x12000, scoped, tag = 'internal scratch']
  %s0 = inlined_call_operand.vmem [shape: f32[8,32], index: 0, kind: input, shape index: {}]
  %s1 = inlined_call_operand.vmem [shape: bf16[32,32], index: 1, kind: input, shape index: {}]
  %s2 = inlined_call_operand.vmem [shape: f32[1,32], index: 2, kind: input, shape index: {}]
  %s3 = inlined_call_operand.vmem [shape: bf16[32,16], index: 3, kind: input, shape index: {}]
  %s4 = inlined_call_operand.vmem [shape: f32[1,16], index: 4, kind: input, shape index: {}]
  %s5 = inlined_call_operand.vmem [shape: bf16[16,2], index: 5, kind: input, shape index: {}]
  %s6 = inlined_call_operand.vmem [shape: f32[1,2], index: 6, kind: input, shape index: {}]
  %s7 = inlined_call_operand.vmem [shape: f32[8,2], index: 7, kind: output, shape index: {}]
  %s8 = sld [smem:[#allocation0]]
  $region38: #{classifier_forward.1} parent=0
    _
  %s10 = ssub.s32 1, %s8
  %s11 = scalar_select 0, %s10, %s8
  // Predicated region
  $region2: #{classifier_forward.1} parent=0 // pred_check
    _
  $region3: #{classifier_forward.1} parent=0 // pred_check_branch
    %13 = sbr.rel (0) target = $region5
  $region4: #{classifier_forward.1} parent=0 // pred_region
    _
  $region5: #{classifier_forward.1} parent=0 // pred_fallthru
    _
  // Predicated region
  $region6: #{classifier_forward.1} parent=0 // pred_check
    _
  $region7: #{classifier_forward.1} parent=0 // pred_check_branch
    %15 = sbr.rel (0) target = $region9
  $region8: #{classifier_forward.1} parent=0 // pred_region
    _
  $region9: #{classifier_forward.1} parent=0 // pred_fallthru
    _
  // Predicated region
  $region10: #{classifier_forward.1} parent=0 // pred_check
    _
  $region11: #{classifier_forward.1} parent=0 // pred_check_branch
    %17 = sbr.rel (0) target = $region13
  $region12: #{classifier_forward.1} parent=0 // pred_region
    _
  $region13: #{classifier_forward.1} parent=0 // pred_fallthru
    _
  // Predicated region
  $region14: #{classifier_forward.1} parent=0 // pred_check
    _
  $region15: #{classifier_forward.1} parent=0 // pred_check_branch
    %19 = sbr.rel (0) target = $region17
  $region16: #{classifier_forward.1} parent=0 // pred_region
    _
  $region17: #{classifier_forward.1} parent=0 // pred_fallthru
    _
  // Predicated region
  $region18: #{classifier_forward.1} parent=0 // pred_check
    _
  $region19: #{classifier_forward.1} parent=0 // pred_check_branch
    %21 = sbr.rel (0) target = $region21
  $region20: #{classifier_forward.1} parent=0 // pred_region
    _
  $region21: #{classifier_forward.1} parent=0 // pred_fallthru
    _
  // Predicated region
  $region22: #{classifier_forward.1} parent=0 // pred_check
    _
  $region23: #{classifier_forward.1} parent=0 // pred_check_branch
    %23 = sbr.rel (0) target = $region25
  $region24: #{classifier_forward.1} parent=0 // pred_region
    _
  $region25: #{classifier_forward.1} parent=0 // pred_fallthru
    _
  // Predicated region
  $region26: #{classifier_forward.1} parent=0 // pred_check
    _
  $region27: #{classifier_forward.1} parent=0 // pred_check_branch
    %25 = sbr.rel (0) target = $region29
  $region28: #{classifier_forward.1} parent=0 // pred_region
    _
  $region29: #{classifier_forward.1} parent=0 // pred_fallthru
    _
  %v27 = vld [vmem:[%s0] sm:$0xff]
  %v28 = vld [vmem:[%s1] sm:$0xf]
  %v29 = vld [vmem:[%s1 + $0x4] sm:$0xf]
  %v30 = vld [vmem:[%s1 + $0x8] sm:$0xf]
  %v31 = vld [vmem:[%s1 + $0xc] sm:$0xf]
  %v32 = vld [vmem:[%s2] sm:$0x1]
  %v33 = vpack.c.bf16 %v27, %v27
  %v35 = vlaneseq
  %v36 = vshrl.u32 %v35, 7
  %v37 = vsub.s32 0, %v36
  %v38 = vrot.slane %v32, %v37
  %v44 = vunpack.c.l.b16 %v28
  %v45 = vunpack.c.l.b16 %v29
  %v46 = vunpack.c.l.b16 %v30
  %v47 = vunpack.c.l.b16 %v31
  %v48 = vpack.c.b16 %v45, %v44
  %v49 = vpack.c.b16 %v47, %v46
  %vm52 = vcmask 261120
  %v54 = vsel %vm52, %v33, 0
  %56 = vmatprep.subr.bf16.mxu0 0
  %57 = vmatpush1.bf16.msra.mxu0 0
  %58 = vmatprep.subr.bf16.mxu0 0
  %59 = vmatpush1.bf16.msra.mxu0 0
  %60 = vmatprep.subr.bf16.mxu0 0
  %61 = vmatpush1.bf16.msra.mxu0 0
  %62 = vmatprep.subr.bf16.mxu0 0
  %63 = vmatpush1.bf16.msra.mxu0 0
  %64 = vmatprep.subr.bf16.mxu0 0
  %65 = vmatpush1.bf16.msra.mxu0 0
  %66 = vmatprep.subr.bf16.mxu0 0
  %67 = vmatpush1.bf16.msra.mxu0 0
  %68 = vmatprep.subr.bf16.mxu0 0
  %69 = vmatpush1.bf16.msra.mxu0 %v49
  %70 = vmatprep.subr.bf16.mxu0 0
  %71 = vmatpush1.bf16.msra.mxu0 %v48
  %72 = vmatprep.subr.bf16.mxu0 0
  %73 = vmatpush2.bf16.msra.mxu0 0
  %74 = vmatprep.subr.bf16.mxu0 0
  %75 = vmatpush2.bf16.msra.mxu0 0
  %76 = vmatprep.subr.bf16.mxu0 0
  %77 = vmatpush2.bf16.msra.mxu0 0
  %78 = vmatprep.subr.bf16.mxu0 0
  %79 = vmatpush2.bf16.msra.mxu0 0
  %80 = vmatprep.subr.bf16.mxu0 0
  %81 = vmatpush2.bf16.msra.mxu0 0
  %82 = vmatprep.subr.bf16.mxu0 0
  %83 = vmatpush2.bf16.msra.mxu0 0
  %84 = vmatprep.subr.bf16.mxu0 0
  %85 = vmatpush2.bf16.msra.mxu0 0
  %86 = vmatprep.subr.bf16.mxu0 0
  %87 = vmatpush2.bf16.msra.mxu0 0
  %88 = vmatprep.mubr.bf16.mxu0 0
  %89 = vmatmul.mubr.bf16.gmra.mxu0 %v54
  %v90 = vpop.f32.mrf.mxu0
  %v91 = vadd.f32 %v38, %v90
  %v92 = vpop.f32.mrf.mxu0
  %v93 = vpop.f32.mrf.mxu0
  %v94 = vpop.f32.mrf.mxu0
  %95 = vdwg.mxu0
  %v96 = vmax.f32 %v91, 0.0
  %v97 = vld [vmem:[%s3] sm:$0xf]
  %v98 = vld [vmem:[%s3 + $0x4] sm:$0xf]
  %v99 = vld [vmem:[%s3 + $0x8] sm:$0xf]
  %v100 = vld [vmem:[%s3 + $0xc] sm:$0xf]
  %v101 = vld [vmem:[%s4] sm:$0x1]
  %v102 = vpack.c.bf16 %v96, %v96
  %v104 = vlaneseq
  %v105 = vshrl.u32 %v104, 7
  %v106 = vsub.s32 0, %v105
  %v107 = vrot.slane %v101, %v106
  %v113 = vunpack.c.l.b16 %v97
  %v114 = vunpack.c.l.b16 %v98
  %v115 = vunpack.c.l.b16 %v99
  %v116 = vunpack.c.l.b16 %v100
  %v117 = vpack.c.b16 %v114, %v113
  %v118 = vpack.c.b16 %v116, %v115
  %v122 = vsel %vm52, %v102, 0
  %124 = vmatprep.subr.bf16.mxu0 0
  %125 = vmatpush1.bf16.msra.mxu0 0
  %126 = vmatprep.subr.bf16.mxu0 0
  %127 = vmatpush1.bf16.msra.mxu0 0
  %128 = vmatprep.subr.bf16.mxu0 0
  %129 = vmatpush1.bf16.msra.mxu0 0
  %130 = vmatprep.subr.bf16.mxu0 0
  %131 = vmatpush1.bf16.msra.mxu0 0
  %132 = vmatprep.subr.bf16.mxu0 0
  %133 = vmatpush1.bf16.msra.mxu0 0
  %134 = vmatprep.subr.bf16.mxu0 0
  %135 = vmatpush1.bf16.msra.mxu0 0
  %136 = vmatprep.subr.bf16.mxu0 0
  %137 = vmatpush1.bf16.msra.mxu0 %v118
  %138 = vmatprep.subr.bf16.mxu0 0
  %139 = vmatpush1.bf16.msra.mxu0 %v117
  %140 = vmatprep.subr.bf16.mxu0 0
  %141 = vmatpush2.bf16.msra.mxu0 0
  %142 = vmatprep.subr.bf16.mxu0 0
  %143 = vmatpush2.bf16.msra.mxu0 0
  %144 = vmatprep.subr.bf16.mxu0 0
  %145 = vmatpush2.bf16.msra.mxu0 0
  %146 = vmatprep.subr.bf16.mxu0 0
  %147 = vmatpush2.bf16.msra.mxu0 0
  %148 = vmatprep.subr.bf16.mxu0 0
  %149 = vmatpush2.bf16.msra.mxu0 0
  %150 = vmatprep.subr.bf16.mxu0 0
  %151 = vmatpush2.bf16.msra.mxu0 0
  %152 = vmatprep.subr.bf16.mxu0 0
  %153 = vmatpush2.bf16.msra.mxu0 0
  %154 = vmatprep.subr.bf16.mxu0 0
  %155 = vmatpush2.bf16.msra.mxu0 0
  %156 = vmatprep.mubr.bf16.mxu0 0
  %157 = vmatmul.mubr.bf16.gmra.mxu0 %v122
  %v158 = vpop.f32.mrf.mxu0
  %v159 = vadd.f32 %v107, %v158
  %v160 = vpop.f32.mrf.mxu0
  %v161 = vpop.f32.mrf.mxu0
  %v162 = vpop.f32.mrf.mxu0
  %163 = vdwg.mxu0
  %v164 = vmax.f32 %v159, 0.0
  %v165 = vld [vmem:[%s5] sm:$0xf]
  %v166 = vld [vmem:[%s5 + $0x4] sm:$0xf]
  %v167 = vld [vmem:[%s6] sm:$0x1]
  %v168 = vpack.c.bf16 %v164, %v164
  %v170 = vlaneseq
  %v171 = vshrl.u32 %v170, 7
  %v172 = vsub.s32 0, %v171
  %v173 = vrot.slane %v167, %v172
  %v177 = vunpack.c.l.b16 %v165
  %v178 = vunpack.c.l.b16 %v166
  %v179 = vpack.c.b16 %v178, %v177
  %vm181 = vcmask 130048
  %v183 = vsel %vm181, %v168, 0
  %185 = vmatprep.subr.bf16.mxu0 0
  %186 = vmatpush1.bf16.msra.mxu0 0
  %187 = vmatprep.subr.bf16.mxu0 0
  %188 = vmatpush1.bf16.msra.mxu0 0
  %189 = vmatprep.subr.bf16.mxu0 0
  %190 = vmatpush1.bf16.msra.mxu0 0
  %191 = vmatprep.subr.bf16.mxu0 0
  %192 = vmatpush1.bf16.msra.mxu0 0
  %193 = vmatprep.subr.bf16.mxu0 0
  %194 = vmatpush1.bf16.msra.mxu0 0
  %195 = vmatprep.subr.bf16.mxu0 0
  %196 = vmatpush1.bf16.msra.mxu0 0
  %197 = vmatprep.subr.bf16.mxu0 0
  %198 = vmatpush1.bf16.msra.mxu0 0
  %199 = vmatprep.subr.bf16.mxu0 0
  %200 = vmatpush1.bf16.msra.mxu0 %v179
  %201 = vmatprep.subr.bf16.mxu0 0
  %202 = vmatpush2.bf16.msra.mxu0 0
  %203 = vmatprep.subr.bf16.mxu0 0
  %204 = vmatpush2.bf16.msra.mxu0 0
  %205 = vmatprep.subr.bf16.mxu0 0
  %206 = vmatpush2.bf16.msra.mxu0 0
  %207 = vmatprep.subr.bf16.mxu0 0
  %208 = vmatpush2.bf16.msra.mxu0 0
  %209 = vmatprep.subr.bf16.mxu0 0
  %210 = vmatpush2.bf16.msra.mxu0 0
  %211 = vmatprep.subr.bf16.mxu0 0
  %212 = vmatpush2.bf16.msra.mxu0 0
  %213 = vmatprep.subr.bf16.mxu0 0
  %214 = vmatpush2.bf16.msra.mxu0 0
  %215 = vmatprep.subr.bf16.mxu0 0
  %216 = vmatpush2.bf16.msra.mxu0 0
  %217 = vmatprep.mubr.bf16.mxu0 0
  %218 = vmatmul.mubr.bf16.gmra.mxu0 %v183
  %v219 = vpop.f32.mrf.mxu0
  %v220 = vadd.f32 %v173, %v219
  %v221 = vpop.f32.mrf.mxu0
  %v222 = vpop.f32.mrf.mxu0
  %v223 = vpop.f32.mrf.mxu0
  %224 = vdwg.mxu0
  %vm225 = vcmask 15360
  %v226 = vsel %vm225, %v220, -inf
  %227 = vmax.xlane.f32.xlu0 %v226
  %v228 = vpop.xlane.xlu0 %227
  %v229 = vsub.f32 %v220, %v228
  %v230 = vmul.f32 %v229, 1.442695
  %v231 = vpow.pop %v230
  %v232 = vsel %vm225, %v231, 0.0
  %233 = vadd.xlane.f32.xlu0 %v232
  %v234 = vpop.xlane.xlu0 %233
  %v235 = vrcp.pop %v234
  %v236 = vmul.f32 %v231, %v235
  %237 = vst.msk [vmem:[%s7] sm:$0xff] %vm225, %v236
  // Predicated region
  $region30: #{classifier_forward.1} parent=0 // pred_check
    _
  $region31: #{classifier_forward.1} parent=0 // pred_check_branch
    %239 = sbr.rel (0) target = $region33
  $region32: #{classifier_forward.1} parent=0 // pred_region
    _
  $region33: #{classifier_forward.1} parent=0 // pred_fallthru
    _
  // Predicated region
  $region34: #{classifier_forward.1} parent=0 // pred_check
    _
  $region35: #{classifier_forward.1} parent=0 // pred_check_branch
    %241 = sbr.rel (0) target = $region37
  $region36: #{classifier_forward.1} parent=0 // pred_region
    _
  $region37: #{classifier_forward.1} parent=0 // pred_fallthru
    _

</llo_original>
